<compile_context>
chip_gen: v7x
topology: tpu7x:2x2x1
jax: 0.10.0
libtpu: 0.0.40
codegen_flags: <defaults>
</compile_context>

<pallas_src>
import jax
import jax.numpy as jnp
from jax.experimental import pallas as pl
from jax.experimental.pallas import tpu as pltpu

EPS = 1e-10

_TARGET_BLOCK_BYTES = 4 << 20   # ~4 MiB input block: 2-6 MiB is the HBM-roofline sweet spot
_MIN_PIPELINE_BYTES = 2 << 20   # arrays bigger than this get >= _MIN_STEPS grid steps
_MIN_STEPS = 4                  # keeps pipelining + room for multi-TC sharding


def _sublane_multiple(dtype) -> int:
    """Minimum row-tile multiple for the given dtype (8 f32, 16 bf16, 32 int8/fp8)."""
    itemsize = jnp.dtype(dtype).itemsize
    return max(8, 32 // itemsize)


def _vmem_budget_and_limit():
    """Generation-aware (pipelined-buffer budget, scoped VMEM limit) in bytes."""
    try:
        cap = pltpu.get_tpu_info().vmem_capacity_bytes
    except Exception:
        cap = 64 << 20  # be conservative if the query is unavailable
    if cap >= (128 << 20):        # v5e / v6e: 128 MiB physical VMEM
        return 48 << 20, 96 << 20
    return 16 << 20, 40 << 20     # v7x: 64 MiB physical VMEM per TensorCore


def _pick_block_rows(n: int, d: int, dtype, vmem_budget: int) -> int:
    """Byte-capped, VMEM-budgeted row tile, rounded to the dtype sublane multiple."""
    itemsize = jnp.dtype(dtype).itemsize
    sub = _sublane_multiple(dtype)
    # Per-row VMEM: double-buffered input + output blocks (4*d*itemsize) plus
    # ~2 f32 temporaries from the in-kernel upcast/scale (8*d bytes).
    per_row_bytes = 4 * d * itemsize + 8 * d
    bn_budget = max(1, vmem_budget // per_row_bytes)
    bn_target = max(1, _TARGET_BLOCK_BYTES // (d * itemsize))
    bn = min(bn_budget, bn_target, n)
    # Force several grid steps for big-enough arrays so the pipeline overlaps
    # load/compute/store and the row axis can split across TensorCores.
    if n * d * itemsize > _MIN_PIPELINE_BYTES:
        bn = min(bn, max(1, pl.cdiv(n, _MIN_STEPS)))
    if bn >= n:
        # Whole-array block along rows: no divisibility constraint applies.
        return n
    bn = max(sub, (bn // sub) * sub)
    return min(bn, n)


def _l2norm_kernel(x_ref, o_ref):
    x = x_ref[...].astype(jnp.float32)
    # Sum of squares along the last (lane) dim: VPU mul + XLU cross-lane reduce.
    ss = jnp.sum(x * x, axis=-1, keepdims=True) + EPS
    # EUP rsqrt on the narrow (bn, 1) column, then broadcast-multiply on the VPU.
    inv = jax.lax.rsqrt(ss)
    o_ref[...] = (x * inv).astype(o_ref.dtype)


def l2norm(x: jax.Array) -> jax.Array:
    """Row-wise L2 normalization matching L2Norm.forward for 2-D input."""
    assert x.ndim == 2, "L2Norm Pallas kernel expects 2-D (N, D) input"
    n, d = x.shape
    itemsize = jnp.dtype(x.dtype).itemsize

    vmem_budget, vmem_limit = _vmem_budget_and_limit()
    bn = _pick_block_rows(n, d, x.dtype, vmem_budget)
    grid = (pl.cdiv(n, bn),)

    cost = pl.CostEstimate(
        flops=3 * n * d,                      # square, reduce-add, scale
        transcendentals=n,                    # one rsqrt per row
        bytes_accessed=2 * n * d * itemsize,  # read + write
    )

    return pl.pallas_call(
        _l2norm_kernel,
        out_shape=jax.ShapeDtypeStruct((n, d), x.dtype),
        grid_spec=pltpu.PrefetchScalarGridSpec(
            num_scalar_prefetch=0,
            grid=grid,
            in_specs=[pl.BlockSpec((bn, d), lambda i: (i, 0))],
            out_specs=pl.BlockSpec((bn, d), lambda i: (i, 0)),
        ),
        compiler_params=pltpu.CompilerParams(
            dimension_semantics=("parallel",),
            vmem_limit_bytes=vmem_limit,
        ),
        cost_estimate=cost,
    )(x)


def l2norm_ref(x: jax.Array) -> jax.Array:
    xf = x.astype(jnp.float32)
    norm = jnp.sqrt(jnp.sum(xf * xf, axis=1) + EPS)
    return (xf / norm[:, None]).astype(x.dtype)


if __name__ == "__main__":
    key = jax.random.PRNGKey(0)
    k0, k1, k2, k3 = jax.random.split(key, 4)

    # Primary small case consistent with the module (batch=8, features=128).
    x = jax.random.normal(k0, (8, 128), dtype=jnp.float32)
    out = l2norm(x)
    jax.block_until_ready(out)
    assert out.shape == x.shape and out.dtype == x.dtype
    assert jnp.allclose(out, l2norm_ref(x), atol=1e-5, rtol=1e-5)

    # Ragged / non-128-multiple case (block dims equal full array -> no constraint).
    x2 = jax.random.normal(k1, (37, 96), dtype=jnp.float32)
    out2 = l2norm(x2)
    jax.block_until_ready(out2)
    assert jnp.allclose(out2, l2norm_ref(x2), atol=1e-5, rtol=1e-5)

    # bf16 I/O case (row tile rounds to a multiple of 16; math stays in f32).
    x3 = jax.random.normal(k2, (32, 128), dtype=jnp.bfloat16)
    out3 = l2norm(x3)
    jax.block_until_ready(out3)
    assert out3.dtype == jnp.bfloat16
    assert jnp.allclose(out3.astype(jnp.float32),
                        l2norm_ref(x3).astype(jnp.float32),
                        atol=2e-2, rtol=2e-2)

    # Medium case that exercises the multi-step pipelined path (>= 4 grid steps).
    x4 = jax.random.normal(k3, (4096, 512), dtype=jnp.float32)
    out4 = l2norm(x4)
    jax.block_until_ready(out4)
    assert jnp.allclose(out4, l2norm_ref(x4), atol=1e-5, rtol=1e-5)

    print("KERNEL_OK")
</pallas_src>

<mosaic_0001>
module attributes {stable_mosaic.version = 11 : i64} {
  func.func @_l2norm_kernel(%arg0: i32, %arg1: memref<8x128xf32, #tpu.memory_space<vmem>>, %arg2: memref<8x128xf32, #tpu.memory_space<vmem>>) attributes {dimension_semantics = [#tpu.dimension_semantics<parallel>], iteration_bounds = array<i64: 1>, scalar_prefetch = 0 : i64, scratch_operands = 0 : i64, tpu.core_type = #tpu.core_type<tc>, window_params = [{transform_indices = @transform_0, window_bounds = array<i64: 8, 128>}, {transform_indices = @transform_1, window_bounds = array<i64: 8, 128>}]} {
    %c0 = arith.constant 0 : index
    %c0_0 = arith.constant 0 : index
    %0 = vector.load %arg1[%c0, %c0_0] : memref<8x128xf32, #tpu.memory_space<vmem>>, vector<8x128xf32>
    %1 = arith.mulf %0, %0 : vector<8x128xf32>
    %cst = arith.constant dense<0.000000e+00> : vector<8xf32>
    %2 = vector.multi_reduction <add>, %1, %cst [1] : vector<8x128xf32> to vector<8xf32>
    %3 = vector.shape_cast %2 : vector<8xf32> to vector<8x1xf32>
    %cst_1 = arith.constant 1.000000e-10 : f32
    %4 = vector.broadcast %cst_1 : f32 to vector<8x1xf32>
    %5 = arith.addf %3, %4 : vector<8x1xf32>
    %6 = math.rsqrt %5 : vector<8x1xf32>
    %7 = vector.broadcast %6 : vector<8x1xf32> to vector<8x128xf32>
    %8 = arith.mulf %0, %7 : vector<8x128xf32>
    %c0_2 = arith.constant 0 : index
    %c0_3 = arith.constant 0 : index
    %9 = vector.load %arg2[%c0_2, %c0_3] : memref<8x128xf32, #tpu.memory_space<vmem>>, vector<8x128xf32>
    tpu.vector_store %arg2[%c0_2, %c0_3], %8 {strides = array<i32>} : memref<8x128xf32, #tpu.memory_space<vmem>>, vector<8x128xf32>,
    return
  }
  func.func @transform_0(%arg0: i32) -> (i32, i32) {
    %c0_i32 = arith.constant 0 : i32
    %c0_i32_0 = arith.constant 0 : i32
    return %arg0, %c0_i32 : i32, i32
  }
  func.func @transform_1(%arg0: i32) -> (i32, i32) {
    %c0_i32 = arith.constant 0 : i32
    %c0_i32_0 = arith.constant 0 : i32
    return %arg0, %c0_i32 : i32, i32
  }
}

</mosaic_0001>

<llo_original>
// kernel: tpu_custom_call.1
$region0: #{tpu_custom_call.1}
  #allocation0 [shape = 'u32[]', space=smem, size = 0x4, offset = 0x4, fixed_abs, tag = 'smem constant byte address 0x4 - core index']
  #allocation1 [shape = 'u32[144,128]{1,0:T(1,128)}', space=vmem, size = 0x12000, scoped, tag = 'internal scratch']
  %s0 = inlined_call_operand.hbm [shape: f32[8,128], index: 0, kind: input, shape index: {}]
  %s1 = inlined_call_operand.hbm [shape: f32[8,128], index: 1, kind: output, shape index: {}]
  %s2 = sld [smem:[#allocation0]]
  $region18: #{tpu_custom_call.1} parent=0
    _
  %s4 = ssub.s32 1, %s2
  %s5 = scalar_select 0, %s4, %s2
  $region1: #{tpu_custom_call.1} parent=0
    #allocation2 [shape = 'u8[4096]{0}', space=vmem, size = 0x1000, scoped, tag = 'input window, operand 0, single buffered']
    #allocation3 [shape = 's32[1]{0}', space=sflag, size = 0x4, scoped, tag = 'scoped memory for tpu_custom_call.1']
    #allocation4 [shape = 's32[1]{0}', space=sflag, size = 0x4, scoped, tag = 'scoped memory for tpu_custom_call.1']
    #allocation5 [shape = 'u8[4096]{0}', space=vmem, size = 0x1000, scoped, tag = 'output window, operand 0, single buffered']
    %6 = vsyncpa [#allocation3], 0
    %7 = vsyncpa [#allocation4], 0
    // Predicated region
    $region2: #{tpu_custom_call.1} parent=1 // pred_check
      _
    $region3: #{tpu_custom_call.1} parent=1 // pred_check_branch
      %9 = sbr.rel (0) target = $region5
    $region4: #{tpu_custom_call.1} parent=1 // pred_region
      %s11 = ssub.s32 128, 128
      %12 = vsyncadd [#allocation3], %s11
      %s14 = sshll.u32 [#allocation2], 4
      %s15 = int_to_ptr.vmem [resolvable:$true] %s14
      %17 = dma.hbm_to_vmem [thread:$0]  %s0, 128, %s15, [#allocation3]
    $region5: #{tpu_custom_call.1} parent=1 // pred_fallthru
      _
    // Predicated region
    $region6: #{tpu_custom_call.1} parent=1 // pred_check
      _
    $region7: #{tpu_custom_call.1} parent=1 // pred_check_branch
      %19 = sbr.rel (0) target = $region9
    $region8: #{tpu_custom_call.1} parent=1 // pred_region
      %20 = dma.done [#allocation3], 128
    $region9: #{tpu_custom_call.1} parent=1 // pred_fallthru
      _
    %v21 = vld [vmem:[#allocation2] sm:$0xff]
    %v22 = vmul.f32 %v21, %v21
    %23 = vadd.xlane.f32.xlu0 %v22
    %v24 = vpop.xlane.xlu0 %23
    %v25 = vadd.f32 %v24, 1e-10
    %v26 = vrsqrt.pop %v25
    %v27 = vmul.f32 %v21, %v26
    %28 = vst [vmem:[#allocation5] sm:$0xff] %v27
    // Predicated region
    $region10: #{tpu_custom_call.1} parent=1 // pred_check
      _
    $region11: #{tpu_custom_call.1} parent=1 // pred_check_branch
      %30 = sbr.rel (0) target = $region13
    $region12: #{tpu_custom_call.1} parent=1 // pred_region
      %s32 = ssub.s32 128, 128
      %33 = vsyncadd [#allocation4], %s32
      %s35 = sshll.u32 [#allocation5], 4
      %s36 = int_to_ptr.vmem [resolvable:$true] %s35
      %38 = dma.vmem_to_hbm [thread:$0]  %s36, 128, %s1, [#allocation4]
    $region13: #{tpu_custom_call.1} parent=1 // pred_fallthru
      _
    // Predicated region
    $region14: #{tpu_custom_call.1} parent=1 // pred_check
      _
    $region15: #{tpu_custom_call.1} parent=1 // pred_check_branch
      %40 = sbr.rel (0) target = $region17
    $region16: #{tpu_custom_call.1} parent=1 // pred_region
      %41 = dma.done [#allocation4], 128
    $region17: #{tpu_custom_call.1} parent=1 // pred_fallthru
      _
    %42 = vsyncpa [#allocation3], 1
    %43 = vsyncpa [#allocation4], 1

</llo_original>
